<compile_context>
chip_gen: v7x
topology: tpu7x:2x2x1
jax: 0.10.0
libtpu: 0.0.40
codegen_flags: <defaults>
</compile_context>

<pallas_src>
import functools

import jax
import jax.numpy as jnp
from jax.experimental import pallas as pl
from jax.experimental.pallas import tpu as pltpu


# -----------------------------------------------------------------------------
# VMEM budget per TPU generation (v7x has only 64 MiB physical per core).
# -----------------------------------------------------------------------------
def _vmem_limit_bytes():
    cap = 64 * 1024 * 1024
    try:
        info_fn = getattr(pltpu, "get_tpu_info", None)
        if info_fn is not None:
            cap = int(info_fn().vmem_capacity_bytes)
    except Exception:
        pass
    return max(32 * 1024 * 1024, min(cap - 8 * 1024 * 1024, 96 * 1024 * 1024))


# -----------------------------------------------------------------------------
# Divisor-safe batch-tile selection (fixes the "nb may not divide N" bug).
# -----------------------------------------------------------------------------
def _pick_batch_tile(n, per_batch_elem_bytes, budget_bytes=4 * 1024 * 1024):
    nb = 1
    for cand in range(1, n + 1):
        if n % cand == 0 and cand * per_batch_elem_bytes <= budget_bytes:
            nb = cand
    return nb


# -----------------------------------------------------------------------------
# Fused head kernel: norm5 BatchNorm (folded scale/shift, eval stats) + ReLU +
# global average pool + classifier Linear.  One grid step = one batch tile.
# -----------------------------------------------------------------------------
def _baseline_head_kernel(x_ref, scale_ref, shift_ref, wct_ref, bc_ref, out_ref):
    # x_ref:     (nb, Hf, Wf, C)    backbone feature map tile (pre-norm5)
    # scale_ref: (1, C)  f32        gamma / sqrt(running_var + eps)
    # shift_ref: (1, C)  f32        beta - running_mean * scale
    # wct_ref:   (C, NC_pad) f32    classifier weight, transposed + lane-padded
    # bc_ref:    (1, NC_pad) f32    classifier bias, lane-padded
    # out_ref:   (1, nb, NC_pad) f32
    nb, H, W, C = x_ref.shape

    x = x_ref[...].astype(jnp.float32)
    scale = scale_ref[...].reshape(1, 1, 1, C)
    shift = shift_ref[...].reshape(1, 1, 1, C)

    # norm5 BatchNorm2d (running stats) + ReLU, all in f32.
    y = jnp.maximum(x * scale + shift, 0.0)

    # adaptive_avg_pool2d((1,1)) == mean over the spatial dims.
    pooled = y.sum(axis=1).sum(axis=1) * (1.0 / (H * W))          # (nb, C)

    # classifier Linear(1024 -> NUM_CLASSES), f32 MXU accumulation.
    logits = jnp.dot(pooled, wct_ref[...],
                     preferred_element_type=jnp.float32) + bc_ref[...]
    out_ref[0] = logits


# -----------------------------------------------------------------------------
# One-time parameter preparation (runs OUTSIDE the jitted forward):
# BN folding, classifier transpose + lane padding.
# -----------------------------------------------------------------------------
def prepare_params(gamma, beta, run_mean, run_var, w_cls, b_cls, eps=1e-5):
    gamma = jnp.asarray(gamma, jnp.float32)
    beta = jnp.asarray(beta, jnp.float32)
    run_mean = jnp.asarray(run_mean, jnp.float32)
    run_var = jnp.asarray(run_var, jnp.float32)

    scale = gamma * jax.lax.rsqrt(run_var + eps)
    shift = beta - run_mean * scale

    nc, c = w_cls.shape
    nc_pad = max(128, ((nc + 127) // 128) * 128)
    w_cls_t = jnp.zeros((c, nc_pad), jnp.float32).at[:, :nc].set(
        jnp.asarray(w_cls, jnp.float32).T)
    b_cls_p = jnp.zeros((1, nc_pad), jnp.float32).at[0, :nc].set(
        jnp.asarray(b_cls, jnp.float32))

    return dict(
        bn_scale=scale.reshape(1, -1),
        bn_shift=shift.reshape(1, -1),
        w_cls_t=w_cls_t,
        b_cls=b_cls_p,
    )


# -----------------------------------------------------------------------------
# Forward wrapper: feats are NHWC (PyTorch's (N, 1024, Hf, Wf) == our
# (N, Hf, Wf, 1024)).
# -----------------------------------------------------------------------------
@functools.partial(jax.jit, static_argnames=("num_classes",))
def baseline_head_forward(feats, params, num_classes):
    N, Hf, Wf, C = feats.shape
    nc_pad = params["w_cls_t"].shape[1]

    per_batch_elem_bytes = Hf * Wf * C * feats.dtype.itemsize
    nb = _pick_batch_tile(N, per_batch_elem_bytes)
    n_bt = N // nb
    assert N % nb == 0 and params["w_cls_t"].shape[0] == C

    out = pl.pallas_call(
        _baseline_head_kernel,
        out_shape=jax.ShapeDtypeStruct((n_bt, nb, nc_pad), jnp.float32),
        grid=(n_bt,),
        in_specs=[
            pl.BlockSpec((nb, Hf, Wf, C), lambda b: (b, 0, 0, 0)),
            pl.BlockSpec((1, C), lambda b: (0, 0)),          # resident constants:
            pl.BlockSpec((1, C), lambda b: (0, 0)),          # constant block index
            pl.BlockSpec((C, nc_pad), lambda b: (0, 0)),     # => DMA'd once
            pl.BlockSpec((1, nc_pad), lambda b: (0, 0)),
        ],
        out_specs=pl.BlockSpec((1, nb, nc_pad), lambda b: (b, 0, 0)),
        compiler_params=pltpu.CompilerParams(
            dimension_semantics=("parallel",),               # disjoint batch tiles
            vmem_limit_bytes=_vmem_limit_bytes(),
        ),
    )(feats, params["bn_scale"], params["bn_shift"],
      params["w_cls_t"], params["b_cls"])

    return out.reshape(N, nc_pad)[:, :num_classes]


# -----------------------------------------------------------------------------
# Pure-JAX reference (f32) for a tolerance check.
# -----------------------------------------------------------------------------
def _reference_forward(feats, gamma, beta, run_mean, run_var, w_cls, b_cls,
                       eps=1e-5):
    y = (feats - run_mean) * jax.lax.rsqrt(run_var + eps) * gamma + beta
    y = jnp.maximum(y, 0.0)
    pooled = y.mean(axis=(1, 2))
    return pooled @ w_cls.T + b_cls


if __name__ == "__main__":
    # densenet121 feature map for a 224x224 input: (N, 1024, 7, 7) -> NHWC.
    N, Hf, Wf, C = 2, 7, 7, 1024
    NUM_CLASSES = 10

    key = jax.random.PRNGKey(0)
    ks = jax.random.split(key, 8)

    feats = jax.random.normal(ks[0], (N, Hf, Wf, C), jnp.float32)

    # norm5 = BatchNorm2d(1024) parameters / running stats
    gamma = 1.0 + 0.01 * jax.random.normal(ks[1], (C,), jnp.float32)
    beta = 0.01 * jax.random.normal(ks[2], (C,), jnp.float32)
    run_mean = 0.01 * jax.random.normal(ks[3], (C,), jnp.float32)
    run_var = 0.5 + jnp.abs(jax.random.normal(ks[4], (C,), jnp.float32))

    # classifier = Linear(1024, NUM_CLASSES)
    w_cls = 0.02 * jax.random.normal(ks[5], (NUM_CLASSES, C), jnp.float32)
    b_cls = 0.02 * jax.random.normal(ks[6], (NUM_CLASSES,), jnp.float32)

    # one-time layout / folding preparation (outside the jitted forward)
    params = prepare_params(gamma, beta, run_mean, run_var, w_cls, b_cls)
    jax.block_until_ready(params)

    logits = baseline_head_forward(feats, params, num_classes=NUM_CLASSES)
    jax.block_until_ready(logits)
    assert logits.shape == (N, NUM_CLASSES)

    ref = _reference_forward(feats, gamma, beta, run_mean, run_var, w_cls, b_cls)
    max_err = float(jnp.max(jnp.abs(logits - ref)))
    assert jnp.allclose(logits, ref, atol=2e-2, rtol=2e-2), f"max abs err {max_err}"

    print("KERNEL_OK")
</pallas_src>

<mosaic_0001>
module attributes {stable_mosaic.version = 11 : i64} {
  func.func @_baseline_head_kernel(%arg0: i32, %arg1: memref<2x7x7x1024xf32, #tpu.memory_space<vmem>>, %arg2: memref<1x1024xf32, #tpu.memory_space<vmem>>, %arg3: memref<1x1024xf32, #tpu.memory_space<vmem>>, %arg4: memref<1024x128xf32, #tpu.memory_space<vmem>>, %arg5: memref<1x128xf32, #tpu.memory_space<vmem>>, %arg6: memref<1x2x128xf32, #tpu.memory_space<vmem>>) attributes {dimension_semantics = [#tpu.dimension_semantics<parallel>], iteration_bounds = array<i64: 1>, scalar_prefetch = 0 : i64, scratch_operands = 0 : i64, tpu.core_type = #tpu.core_type<tc>, window_params = [{transform_indices = @transform_0, window_bounds = array<i64: 2, 7, 7, 1024>}, {pipeline_mode = #tpu.pipeline_mode<synchronous>, transform_indices = @transform_1, window_bounds = array<i64: 1, 1024>}, {pipeline_mode = #tpu.pipeline_mode<synchronous>, transform_indices = @transform_2, window_bounds = array<i64: 1, 1024>}, {pipeline_mode = #tpu.pipeline_mode<synchronous>, transform_indices = @transform_3, window_bounds = array<i64: 1024, 128>}, {pipeline_mode = #tpu.pipeline_mode<synchronous>, transform_indices = @transform_4, window_bounds = array<i64: 1, 128>}, {transform_indices = @transform_5, window_bounds = array<i64: 1, 2, 128>}]} {
    %c0 = arith.constant 0 : index
    %c0_0 = arith.constant 0 : index
    %c0_1 = arith.constant 0 : index
    %c0_2 = arith.constant 0 : index
    %0 = vector.load %arg1[%c0, %c0_0, %c0_1, %c0_2] : memref<2x7x7x1024xf32, #tpu.memory_space<vmem>>, vector<2x7x7x1024xf32>
    %c0_3 = arith.constant 0 : index
    %c0_4 = arith.constant 0 : index
    %1 = vector.load %arg2[%c0_3, %c0_4] : memref<1x1024xf32, #tpu.memory_space<vmem>>, vector<1x1024xf32>
    %2 = vector.shape_cast %1 : vector<1x1024xf32> to vector<1x1x1x1024xf32>
    %c0_5 = arith.constant 0 : index
    %c0_6 = arith.constant 0 : index
    %3 = vector.load %arg3[%c0_5, %c0_6] : memref<1x1024xf32, #tpu.memory_space<vmem>>, vector<1x1024xf32>
    %4 = vector.shape_cast %3 : vector<1x1024xf32> to vector<1x1x1x1024xf32>
    %5 = vector.broadcast %2 : vector<1x1x1x1024xf32> to vector<2x7x7x1024xf32>
    %6 = arith.mulf %0, %5 : vector<2x7x7x1024xf32>
    %7 = vector.broadcast %4 : vector<1x1x1x1024xf32> to vector<2x7x7x1024xf32>
    %8 = arith.addf %6, %7 : vector<2x7x7x1024xf32>
    %cst = arith.constant 0.000000e+00 : f32
    %9 = vector.broadcast %cst : f32 to vector<2x7x7x1024xf32>
    %10 = arith.maximumf %8, %9 : vector<2x7x7x1024xf32>
    %cst_7 = arith.constant dense<0.000000e+00> : vector<2x7x1024xf32>
    %11 = vector.multi_reduction <add>, %10, %cst_7 [1] : vector<2x7x7x1024xf32> to vector<2x7x1024xf32>
    %cst_8 = arith.constant dense<0.000000e+00> : vector<2x1024xf32>
    %12 = vector.multi_reduction <add>, %11, %cst_8 [1] : vector<2x7x1024xf32> to vector<2x1024xf32>
    %cst_9 = arith.constant 0.0204081628 : f32
    %13 = vector.broadcast %cst_9 : f32 to vector<2x1024xf32>
    %14 = arith.mulf %12, %13 : vector<2x1024xf32>
    %c0_10 = arith.constant 0 : index
    %c0_11 = arith.constant 0 : index
    %15 = vector.load %arg4[%c0_10, %c0_11] : memref<1024x128xf32, #tpu.memory_space<vmem>>, vector<1024x128xf32>
    %cst_12 = arith.constant dense<0.000000e+00> : vector<2x128xf32>
    %16 = tpu.matmul %14, %15, %cst_12 {dimension_numbers = #tpu.dot_dimension_numbers<[1], [0], [0], [1], [0, 0, 1, 1], [], []>} : vector<2x1024xf32>, vector<1024x128xf32>, vector<2x128xf32> -> vector<2x128xf32>
    %c0_13 = arith.constant 0 : index
    %c0_14 = arith.constant 0 : index
    %17 = vector.load %arg5[%c0_13, %c0_14] : memref<1x128xf32, #tpu.memory_space<vmem>>, vector<1x128xf32>
    %18 = vector.broadcast %17 : vector<1x128xf32> to vector<2x128xf32>
    %19 = arith.addf %16, %18 : vector<2x128xf32>
    %c0_15 = arith.constant 0 : index
    %c0_16 = arith.constant 0 : index
    %c0_17 = arith.constant 0 : index
    %20 = vector.load %arg6[%c0_15, %c0_16, %c0_17] : memref<1x2x128xf32, #tpu.memory_space<vmem>>, vector<1x2x128xf32>
    %21 = vector.shape_cast %20 : vector<1x2x128xf32> to vector<2x128xf32>
    %22 = vector.shape_cast %19 : vector<2x128xf32> to vector<1x2x128xf32>
    tpu.vector_store %arg6[%c0_15, %c0_16, %c0_17], %22 {strides = array<i32>} : memref<1x2x128xf32, #tpu.memory_space<vmem>>, vector<1x2x128xf32>,
    return
  }
  func.func @transform_0(%arg0: i32) -> (i32, i32, i32, i32) {
    %c0_i32 = arith.constant 0 : i32
    %c0_i32_0 = arith.constant 0 : i32
    %c0_i32_1 = arith.constant 0 : i32
    %c0_i32_2 = arith.constant 0 : i32
    return %arg0, %c0_i32, %c0_i32_0, %c0_i32_1 : i32, i32, i32, i32
  }
  func.func @transform_1(%arg0: i32) -> (i32, i32) {
    %c0_i32 = arith.constant 0 : i32
    %c0_i32_0 = arith.constant 0 : i32
    %c0_i32_1 = arith.constant 0 : i32
    return %c0_i32, %c0_i32_0 : i32, i32
  }
  func.func @transform_2(%arg0: i32) -> (i32, i32) {
    %c0_i32 = arith.constant 0 : i32
    %c0_i32_0 = arith.constant 0 : i32
    %c0_i32_1 = arith.constant 0 : i32
    return %c0_i32, %c0_i32_0 : i32, i32
  }
  func.func @transform_3(%arg0: i32) -> (i32, i32) {
    %c0_i32 = arith.constant 0 : i32
    %c0_i32_0 = arith.constant 0 : i32
    %c0_i32_1 = arith.constant 0 : i32
    return %c0_i32, %c0_i32_0 : i32, i32
  }
  func.func @transform_4(%arg0: i32) -> (i32, i32) {
    %c0_i32 = arith.constant 0 : i32
    %c0_i32_0 = arith.constant 0 : i32
    %c0_i32_1 = arith.constant 0 : i32
    return %c0_i32, %c0_i32_0 : i32, i32
  }
  func.func @transform_5(%arg0: i32) -> (i32, i32, i32) {
    %c0_i32 = arith.constant 0 : i32
    %c0_i32_0 = arith.constant 0 : i32
    %c0_i32_1 = arith.constant 0 : i32
    return %arg0, %c0_i32, %c0_i32_0 : i32, i32, i32
  }
}

</mosaic_0001>

<llo_original>
// kernel: baseline_head_forward.1
$region0: #{baseline_head_forward.1}
  #allocation0 [shape = 'u32[]', space=smem, size = 0x4, offset = 0x4, fixed_abs, tag = 'smem constant byte address 0x4 - core index']
  #allocation1 [shape = 'u32[144,128]{1,0:T(1,128)}', space=vmem, size = 0x12000, scoped, tag = 'internal scratch']
  %s0 = inlined_call_operand.vmem [shape: f32[2,7,7,1024], index: 0, kind: input, shape index: {}]
  %s1 = inlined_call_operand.vmem [shape: f32[1,1024], index: 1, kind: input, shape index: {}]
  %s2 = inlined_call_operand.vmem [shape: f32[1,1024], index: 2, kind: input, shape index: {}]
  %s3 = inlined_call_operand.vmem [shape: f32[1024,128], index: 3, kind: input, shape index: {}]
  %s4 = inlined_call_operand.vmem [shape: f32[1,128], index: 4, kind: input, shape index: {}]
  %s5 = inlined_call_operand.hbm [shape: f32[1,2,128], index: 5, kind: output, shape index: {}]
  %s6 = sld [smem:[#allocation0]]
  $region30: #{baseline_head_forward.1} parent=0
    _
  %s8 = ssub.s32 1, %s6
  %s9 = scalar_select 0, %s8, %s6
  $region1: #{baseline_head_forward.1} parent=0
    #allocation2 [shape = 'u8[1024]{0}', space=vmem, size = 0x400, scoped, tag = 'output window, operand 0, single buffered']
    #allocation3 [shape = 's32[1]{0}', space=sflag, size = 0x4, scoped, tag = 'scoped memory for baseline_head_forward.1']
    %10 = vsyncpa [#allocation3], 0
    // Predicated region
    $region2: #{baseline_head_forward.1} parent=1 // pred_check
      _
    $region3: #{baseline_head_forward.1} parent=1 // pred_check_branch
      %12 = sbr.rel (0) target = $region5
    $region4: #{baseline_head_forward.1} parent=1 // pred_region
      _
    $region5: #{baseline_head_forward.1} parent=1 // pred_fallthru
      _
    // Predicated region
    $region6: #{baseline_head_forward.1} parent=1 // pred_check
      _
    $region7: #{baseline_head_forward.1} parent=1 // pred_check_branch
      %14 = sbr.rel (0) target = $region9
    $region8: #{baseline_head_forward.1} parent=1 // pred_region
      _
    $region9: #{baseline_head_forward.1} parent=1 // pred_fallthru
      _
    // Predicated region
    $region10: #{baseline_head_forward.1} parent=1 // pred_check
      _
    $region11: #{baseline_head_forward.1} parent=1 // pred_check_branch
      %16 = sbr.rel (0) target = $region13
    $region12: #{baseline_head_forward.1} parent=1 // pred_region
      _
    $region13: #{baseline_head_forward.1} parent=1 // pred_fallthru
      _
    // Predicated region
    $region14: #{baseline_head_forward.1} parent=1 // pred_check
      _
    $region15: #{baseline_head_forward.1} parent=1 // pred_check_branch
      %18 = sbr.rel (0) target = $region17
    $region16: #{baseline_head_forward.1} parent=1 // pred_region
      _
    $region17: #{baseline_head_forward.1} parent=1 // pred_fallthru
      _
    // Predicated region
    $region18: #{baseline_head_forward.1} parent=1 // pred_check
      _
    $region19: #{baseline_head_forward.1} parent=1 // pred_check_branch
      %20 = sbr.rel (0) target = $region21
    $region20: #{baseline_head_forward.1} parent=1 // pred_region
      _
    $region21: #{baseline_head_forward.1} parent=1 // pred_fallthru
      _
    %v21 = vld [vmem:[%s0] sm:$0x7f]
    %v22 = vld [vmem:[%s0 + $0x8] sm:$0x7f]
    %v23 = vld [vmem:[%s0 + $0x10] sm:$0x7f]
    %v24 = vld [vmem:[%s0 + $0x18] sm:$0x7f]
    %v25 = vld [vmem:[%s0 + $0x20] sm:$0x7f]
    %v26 = vld [vmem:[%s0 + $0x28] sm:$0x7f]
    %v27 = vld [vmem:[%s0 + $0x30] sm:$0x7f]
    %v28 = vld [vmem:[%s0 + $0x38] sm:$0x7f]
    %v29 = vld [vmem:[%s0 + $0x40] sm:$0x7f]
    %v30 = vld [vmem:[%s0 + $0x48] sm:$0x7f]
    %v31 = vld [vmem:[%s0 + $0x50] sm:$0x7f]
    %v32 = vld [vmem:[%s0 + $0x58] sm:$0x7f]
    %v33 = vld [vmem:[%s0 + $0x60] sm:$0x7f]
    %v34 = vld [vmem:[%s0 + $0x68] sm:$0x7f]
    %v35 = vld [vmem:[%s0 + $0x70] sm:$0x7f]
    %v36 = vld [vmem:[%s0 + $0x78] sm:$0x7f]
    %v37 = vld [vmem:[%s0 + $0x80] sm:$0x7f]
    %v38 = vld [vmem:[%s0 + $0x88] sm:$0x7f]
    %v39 = vld [vmem:[%s0 + $0x90] sm:$0x7f]
    %v40 = vld [vmem:[%s0 + $0x98] sm:$0x7f]
    %v41 = vld [vmem:[%s0 + $0xa0] sm:$0x7f]
    %v42 = vld [vmem:[%s0 + $0xa8] sm:$0x7f]
    %v43 = vld [vmem:[%s0 + $0xb0] sm:$0x7f]
    %v44 = vld [vmem:[%s0 + $0xb8] sm:$0x7f]
    %v45 = vld [vmem:[%s0 + $0xc0] sm:$0x7f]
    %v46 = vld [vmem:[%s0 + $0xc8] sm:$0x7f]
    %v47 = vld [vmem:[%s0 + $0xd0] sm:$0x7f]
    %v48 = vld [vmem:[%s0 + $0xd8] sm:$0x7f]
    %v49 = vld [vmem:[%s0 + $0xe0] sm:$0x7f]
    %v50 = vld [vmem:[%s0 + $0xe8] sm:$0x7f]
    %v51 = vld [vmem:[%s0 + $0xf0] sm:$0x7f]
    %v52 = vld [vmem:[%s0 + $0xf8] sm:$0x7f]
    %v53 = vld [vmem:[%s0 + $0x100] sm:$0x7f]
    %v54 = vld [vmem:[%s0 + $0x108] sm:$0x7f]
    %v55 = vld [vmem:[%s0 + $0x110] sm:$0x7f]
    %v56 = vld [vmem:[%s0 + $0x118] sm:$0x7f]
    %v57 = vld [vmem:[%s0 + $0x120] sm:$0x7f]
    %v58 = vld [vmem:[%s0 + $0x128] sm:$0x7f]
    %v59 = vld [vmem:[%s0 + $0x130] sm:$0x7f]
    %v60 = vld [vmem:[%s0 + $0x138] sm:$0x7f]
    %v61 = vld [vmem:[%s0 + $0x140] sm:$0x7f]
    %v62 = vld [vmem:[%s0 + $0x148] sm:$0x7f]
    %v63 = vld [vmem:[%s0 + $0x150] sm:$0x7f]
    %v64 = vld [vmem:[%s0 + $0x158] sm:$0x7f]
    %v65 = vld [vmem:[%s0 + $0x160] sm:$0x7f]
    %v66 = vld [vmem:[%s0 + $0x168] sm:$0x7f]
    %v67 = vld [vmem:[%s0 + $0x170] sm:$0x7f]
    %v68 = vld [vmem:[%s0 + $0x178] sm:$0x7f]
    %v69 = vld [vmem:[%s0 + $0x180] sm:$0x7f]
    %v70 = vld [vmem:[%s0 + $0x188] sm:$0x7f]
    %v71 = vld [vmem:[%s0 + $0x190] sm:$0x7f]
    %v72 = vld [vmem:[%s0 + $0x198] sm:$0x7f]
    %v73 = vld [vmem:[%s0 + $0x1a0] sm:$0x7f]
    %v74 = vld [vmem:[%s0 + $0x1a8] sm:$0x7f]
    %v75 = vld [vmem:[%s0 + $0x1b0] sm:$0x7f]
    %v76 = vld [vmem:[%s0 + $0x1b8] sm:$0x7f]
    %v77 = vld [vmem:[%s0 + $0x1c0] sm:$0x7f]
    %v78 = vld [vmem:[%s0 + $0x1c8] sm:$0x7f]
    %v79 = vld [vmem:[%s0 + $0x1d0] sm:$0x7f]
    %v80 = vld [vmem:[%s0 + $0x1d8] sm:$0x7f]
    %v81 = vld [vmem:[%s0 + $0x1e0] sm:$0x7f]
    %v82 = vld [vmem:[%s0 + $0x1e8] sm:$0x7f]
    %v83 = vld [vmem:[%s0 + $0x1f0] sm:$0x7f]
    %v84 = vld [vmem:[%s0 + $0x1f8] sm:$0x7f]
    %v85 = vld [vmem:[%s0 + $0x200] sm:$0x7f]
    %v86 = vld [vmem:[%s0 + $0x208] sm:$0x7f]
    %v87 = vld [vmem:[%s0 + $0x210] sm:$0x7f]
    %v88 = vld [vmem:[%s0 + $0x218] sm:$0x7f]
    %v89 = vld [vmem:[%s0 + $0x220] sm:$0x7f]
    %v90 = vld [vmem:[%s0 + $0x228] sm:$0x7f]
    %v91 = vld [vmem:[%s0 + $0x230] sm:$0x7f]
    %v92 = vld [vmem:[%s0 + $0x238] sm:$0x7f]
    %v93 = vld [vmem:[%s0 + $0x240] sm:$0x7f]
    %v94 = vld [vmem:[%s0 + $0x248] sm:$0x7f]
    %v95 = vld [vmem:[%s0 + $0x250] sm:$0x7f]
    %v96 = vld [vmem:[%s0 + $0x258] sm:$0x7f]
    %v97 = vld [vmem:[%s0 + $0x260] sm:$0x7f]
    %v98 = vld [vmem:[%s0 + $0x268] sm:$0x7f]
    %v99 = vld [vmem:[%s0 + $0x270] sm:$0x7f]
    %v100 = vld [vmem:[%s0 + $0x278] sm:$0x7f]
    %v101 = vld [vmem:[%s0 + $0x280] sm:$0x7f]
    %v102 = vld [vmem:[%s0 + $0x288] sm:$0x7f]
    %v103 = vld [vmem:[%s0 + $0x290] sm:$0x7f]
    %v104 = vld [vmem:[%s0 + $0x298] sm:$0x7f]
    %v105 = vld [vmem:[%s0 + $0x2a0] sm:$0x7f]
    %v106 = vld [vmem:[%s0 + $0x2a8] sm:$0x7f]
    %v107 = vld [vmem:[%s0 + $0x2b0] sm:$0x7f]
    %v108 = vld [vmem:[%s0 + $0x2b8] sm:$0x7f]
    %v109 = vld [vmem:[%s0 + $0x2c0] sm:$0x7f]
    %v110 = vld [vmem:[%s0 + $0x2c8] sm:$0x7f]
    %v111 = vld [vmem:[%s0 + $0x2d0] sm:$0x7f]
    %v112 = vld [vmem:[%s0 + $0x2d8] sm:$0x7f]
    %v113 = vld [vmem:[%s0 + $0x2e0] sm:$0x7f]
    %v114 = vld [vmem:[%s0 + $0x2e8] sm:$0x7f]
    %v115 = vld [vmem:[%s0 + $0x2f0] sm:$0x7f]
    %v116 = vld [vmem:[%s0 + $0x2f8] sm:$0x7f]
    %v117 = vld [vmem:[%s0 + $0x300] sm:$0x7f]
    %v118 = vld [vmem:[%s0 + $0x308] sm:$0x7f]
    %v119 = vld [vmem:[%s0 + $0x310] sm:$0x7f]
    %v120 = vld [vmem:[%s0 + $0x318] sm:$0x7f]
    %v121 = vld [vmem:[%s0 + $0x320] sm:$0x7f]
    %v122 = vld [vmem:[%s0 + $0x328] sm:$0x7f]
    %v123 = vld [vmem:[%s0 + $0x330] sm:$0x7f]
    %v124 = vld [vmem:[%s0 + $0x338] sm:$0x7f]
    %v125 = vld [vmem:[%s0 + $0x340] sm:$0x7f]
    %v126 = vld [vmem:[%s0 + $0x348] sm:$0x7f]
    %v127 = vld [vmem:[%s0 + $0x350] sm:$0x7f]
    %v128 = vld [vmem:[%s0 + $0x358] sm:$0x7f]
    %v129 = vld [vmem:[%s0 + $0x360] sm:$0x7f]
    %v130 = vld [vmem:[%s0 + $0x368] sm:$0x7f]
    %v131 = vld [vmem:[%s0 + $0x370] sm:$0x7f]
    %v132 = vld [vmem:[%s0 + $0x378] sm:$0x7f]
    %v133 = vld [vmem:[%s1] sm:$0xff]
    %v134 = vld [vmem:[%s2] sm:$0xff]
    %v136 = vlaneseq
    %v137 = vshrl.u32 %v136, 7
    %v138 = vsub.s32 0, %v137
    %v139 = vrot.slane %v133, %v138
    %v140 = vlaneseq
    %v141 = vshrl.u32 %v140, 7
    %v142 = vsub.s32 1, %v141
    %v143 = vrot.slane %v133, %v142
    %v144 = vlaneseq
    %v145 = vshrl.u32 %v144, 7
    %v146 = vsub.s32 2, %v145
    %v147 = vrot.slane %v133, %v146
    %v148 = vlaneseq
    %v149 = vshrl.u32 %v148, 7
    %v150 = vsub.s32 3, %v149
    %v151 = vrot.slane %v133, %v150
    %v152 = vlaneseq
    %v153 = vshrl.u32 %v152, 7
    %v154 = vsub.s32 4, %v153
    %v155 = vrot.slane %v133, %v154
    %v156 = vlaneseq
    %v157 = vshrl.u32 %v156, 7
    %v158 = vsub.s32 5, %v157
    %v159 = vrot.slane %v133, %v158
    %v160 = vlaneseq
    %v161 = vshrl.u32 %v160, 7
    %v162 = vsub.s32 6, %v161
    %v163 = vrot.slane %v133, %v162
    %v164 = vlaneseq
    %v165 = vshrl.u32 %v164, 7
    %v166 = vsub.s32 7, %v165
    %v167 = vrot.slane %v133, %v166
    %v176 = vmul.f32 %v21, %v139
    %v177 = vmul.f32 %v22, %v143
    %v178 = vmul.f32 %v23, %v147
    %v179 = vmul.f32 %v24, %v151
    %v180 = vmul.f32 %v25, %v155
    %v181 = vmul.f32 %v26, %v159
    %v182 = vmul.f32 %v27, %v163
    %v183 = vmul.f32 %v28, %v167
    %v184 = vmul.f32 %v29, %v139
    %v185 = vmul.f32 %v30, %v143
    %v186 = vmul.f32 %v31, %v147
    %v187 = vmul.f32 %v32, %v151
    %v188 = vmul.f32 %v33, %v155
    %v189 = vmul.f32 %v34, %v159
    %v190 = vmul.f32 %v35, %v163
    %v191 = vmul.f32 %v36, %v167
    %v192 = vmul.f32 %v37, %v139
    %v193 = vmul.f32 %v38, %v143
    %v194 = vmul.f32 %v39, %v147
    %v195 = vmul.f32 %v40, %v151
    %v196 = vmul.f32 %v41, %v155
    %v197 = vmul.f32 %v42, %v159
    %v198 = vmul.f32 %v43, %v163
    %v199 = vmul.f32 %v44, %v167
    %v200 = vmul.f32 %v45, %v139
    %v201 = vmul.f32 %v46, %v143
    %v202 = vmul.f32 %v47, %v147
    %v203 = vmul.f32 %v48, %v151
    %v204 = vmul.f32 %v49, %v155
    %v205 = vmul.f32 %v50, %v159
    %v206 = vmul.f32 %v51, %v163
    %v207 = vmul.f32 %v52, %v167
    %v208 = vmul.f32 %v53, %v139
    %v209 = vmul.f32 %v54, %v143
    %v210 = vmul.f32 %v55, %v147
    %v211 = vmul.f32 %v56, %v151
    %v212 = vmul.f32 %v57, %v155
    %v213 = vmul.f32 %v58, %v159
    %v214 = vmul.f32 %v59, %v163
    %v215 = vmul.f32 %v60, %v167
    %v216 = vmul.f32 %v61, %v139
    %v217 = vmul.f32 %v62, %v143
    %v218 = vmul.f32 %v63, %v147
    %v219 = vmul.f32 %v64, %v151
    %v220 = vmul.f32 %v65, %v155
    %v221 = vmul.f32 %v66, %v159
    %v222 = vmul.f32 %v67, %v163
    %v223 = vmul.f32 %v68, %v167
    %v224 = vmul.f32 %v69, %v139
    %v225 = vmul.f32 %v70, %v143
    %v226 = vmul.f32 %v71, %v147
    %v227 = vmul.f32 %v72, %v151
    %v228 = vmul.f32 %v73, %v155
    %v229 = vmul.f32 %v74, %v159
    %v230 = vmul.f32 %v75, %v163
    %v231 = vmul.f32 %v76, %v167
    %v232 = vmul.f32 %v77, %v139
    %v233 = vmul.f32 %v78, %v143
    %v234 = vmul.f32 %v79, %v147
    %v235 = vmul.f32 %v80, %v151
    %v236 = vmul.f32 %v81, %v155
    %v237 = vmul.f32 %v82, %v159
    %v238 = vmul.f32 %v83, %v163
    %v239 = vmul.f32 %v84, %v167
    %v240 = vmul.f32 %v85, %v139
    %v241 = vmul.f32 %v86, %v143
    %v242 = vmul.f32 %v87, %v147
    %v243 = vmul.f32 %v88, %v151
    %v244 = vmul.f32 %v89, %v155
    %v245 = vmul.f32 %v90, %v159
    %v246 = vmul.f32 %v91, %v163
    %v247 = vmul.f32 %v92, %v167
    %v248 = vmul.f32 %v93, %v139
    %v249 = vmul.f32 %v94, %v143
    %v250 = vmul.f32 %v95, %v147
    %v251 = vmul.f32 %v96, %v151
    %v252 = vmul.f32 %v97, %v155
    %v253 = vmul.f32 %v98, %v159
    %v254 = vmul.f32 %v99, %v163
    %v255 = vmul.f32 %v100, %v167
    %v256 = vmul.f32 %v101, %v139
    %v257 = vmul.f32 %v102, %v143
    %v258 = vmul.f32 %v103, %v147
    %v259 = vmul.f32 %v104, %v151
    %v260 = vmul.f32 %v105, %v155
    %v261 = vmul.f32 %v106, %v159
    %v262 = vmul.f32 %v107, %v163
    %v263 = vmul.f32 %v108, %v167
    %v264 = vmul.f32 %v109, %v139
    %v265 = vmul.f32 %v110, %v143
    %v266 = vmul.f32 %v111, %v147
    %v267 = vmul.f32 %v112, %v151
    %v268 = vmul.f32 %v113, %v155
    %v269 = vmul.f32 %v114, %v159
    %v270 = vmul.f32 %v115, %v163
    %v271 = vmul.f32 %v116, %v167
    %v272 = vmul.f32 %v117, %v139
    %v273 = vmul.f32 %v118, %v143
    %v274 = vmul.f32 %v119, %v147
    %v275 = vmul.f32 %v120, %v151
    %v276 = vmul.f32 %v121, %v155
    %v277 = vmul.f32 %v122, %v159
    %v278 = vmul.f32 %v123, %v163
    %v279 = vmul.f32 %v124, %v167
    %v280 = vmul.f32 %v125, %v139
    %v281 = vmul.f32 %v126, %v143
    %v282 = vmul.f32 %v127, %v147
    %v283 = vmul.f32 %v128, %v151
    %v284 = vmul.f32 %v129, %v155
    %v285 = vmul.f32 %v130, %v159
    %v286 = vmul.f32 %v131, %v163
    %v287 = vmul.f32 %v132, %v167
    %v289 = vlaneseq
    %v290 = vshrl.u32 %v289, 7
    %v291 = vsub.s32 0, %v290
    %v292 = vrot.slane %v134, %v291
    %v293 = vlaneseq
    %v294 = vshrl.u32 %v293, 7
    %v295 = vsub.s32 1, %v294
    %v296 = vrot.slane %v134, %v295
    %v297 = vlaneseq
    %v298 = vshrl.u32 %v297, 7
    %v299 = vsub.s32 2, %v298
    %v300 = vrot.slane %v134, %v299
    %v301 = vlaneseq
    %v302 = vshrl.u32 %v301, 7
    %v303 = vsub.s32 3, %v302
    %v304 = vrot.slane %v134, %v303
    %v305 = vlaneseq
    %v306 = vshrl.u32 %v305, 7
    %v307 = vsub.s32 4, %v306
    %v308 = vrot.slane %v134, %v307
    %v309 = vlaneseq
    %v310 = vshrl.u32 %v309, 7
    %v311 = vsub.s32 5, %v310
    %v312 = vrot.slane %v134, %v311
    %v313 = vlaneseq
    %v314 = vshrl.u32 %v313, 7
    %v315 = vsub.s32 6, %v314
    %v316 = vrot.slane %v134, %v315
    %v317 = vlaneseq
    %v318 = vshrl.u32 %v317, 7
    %v319 = vsub.s32 7, %v318
    %v320 = vrot.slane %v134, %v319
    %v329 = vadd.f32 %v176, %v292
    %v330 = vadd.f32 %v177, %v296
    %v331 = vadd.f32 %v178, %v300
    %v332 = vadd.f32 %v179, %v304
    %v333 = vadd.f32 %v180, %v308
    %v334 = vadd.f32 %v181, %v312
    %v335 = vadd.f32 %v182, %v316
    %v336 = vadd.f32 %v183, %v320
    %v337 = vadd.f32 %v184, %v292
    %v338 = vadd.f32 %v185, %v296
    %v339 = vadd.f32 %v186, %v300
    %v340 = vadd.f32 %v187, %v304
    %v341 = vadd.f32 %v188, %v308
    %v342 = vadd.f32 %v189, %v312
    %v343 = vadd.f32 %v190, %v316
    %v344 = vadd.f32 %v191, %v320
    %v345 = vadd.f32 %v192, %v292
    %v346 = vadd.f32 %v193, %v296
    %v347 = vadd.f32 %v194, %v300
    %v348 = vadd.f32 %v195, %v304
    %v349 = vadd.f32 %v196, %v308
    %v350 = vadd.f32 %v197, %v312
    %v351 = vadd.f32 %v198, %v316
    %v352 = vadd.f32 %v199, %v320
    %v353 = vadd.f32 %v200, %v292
    %v354 = vadd.f32 %v201, %v296
    %v355 = vadd.f32 %v202, %v300
    %v356 = vadd.f32 %v203, %v304
    %v357 = vadd.f32 %v204, %v308
    %v358 = vadd.f32 %v205, %v312
    %v359 = vadd.f32 %v206, %v316
    %v360 = vadd.f32 %v207, %v320
    %v361 = vadd.f32 %v208, %v292
    %v362 = vadd.f32 %v209, %v296
    %v363 = vadd.f32 %v210, %v300
    %v364 = vadd.f32 %v211, %v304
    %v365 = vadd.f32 %v212, %v308
    %v366 = vadd.f32 %v213, %v312
    %v367 = vadd.f32 %v214, %v316
    %v368 = vadd.f32 %v215, %v320
    %v369 = vadd.f32 %v216, %v292
    %v370 = vadd.f32 %v217, %v296
    %v371 = vadd.f32 %v218, %v300
    %v372 = vadd.f32 %v219, %v304
    %v373 = vadd.f32 %v220, %v308
    %v374 = vadd.f32 %v221, %v312
    %v375 = vadd.f32 %v222, %v316
    %v376 = vadd.f32 %v223, %v320
    %v377 = vadd.f32 %v224, %v292
    %v378 = vadd.f32 %v225, %v296
    %v379 = vadd.f32 %v226, %v300
    %v380 = vadd.f32 %v227, %v304
    %v381 = vadd.f32 %v228, %v308
    %v382 = vadd.f32 %v229, %v312
    %v383 = vadd.f32 %v230, %v316
    %v384 = vadd.f32 %v231, %v320
    %v385 = vadd.f32 %v232, %v292
    %v386 = vadd.f32 %v233, %v296
    %v387 = vadd.f32 %v234, %v300
    %v388 = vadd.f32 %v235, %v304
    %v389 = vadd.f32 %v236, %v308
    %v390 = vadd.f32 %v237, %v312
    %v391 = vadd.f32 %v238, %v316
    %v392 = vadd.f32 %v239, %v320
    %v393 = vadd.f32 %v240, %v292
    %v394 = vadd.f32 %v241, %v296
    %v395 = vadd.f32 %v242, %v300
    %v396 = vadd.f32 %v243, %v304
    %v397 = vadd.f32 %v244, %v308
    %v398 = vadd.f32 %v245, %v312
    %v399 = vadd.f32 %v246, %v316
    %v400 = vadd.f32 %v247, %v320
    %v401 = vadd.f32 %v248, %v292
    %v402 = vadd.f32 %v249, %v296
    %v403 = vadd.f32 %v250, %v300
    %v404 = vadd.f32 %v251, %v304
    %v405 = vadd.f32 %v252, %v308
    %v406 = vadd.f32 %v253, %v312
    %v407 = vadd.f32 %v254, %v316
    %v408 = vadd.f32 %v255, %v320
    %v409 = vadd.f32 %v256, %v292
    %v410 = vadd.f32 %v257, %v296
    %v411 = vadd.f32 %v258, %v300
    %v412 = vadd.f32 %v259, %v304
    %v413 = vadd.f32 %v260, %v308
    %v414 = vadd.f32 %v261, %v312
    %v415 = vadd.f32 %v262, %v316
    %v416 = vadd.f32 %v263, %v320
    %v417 = vadd.f32 %v264, %v292
    %v418 = vadd.f32 %v265, %v296
    %v419 = vadd.f32 %v266, %v300
    %v420 = vadd.f32 %v267, %v304
    %v421 = vadd.f32 %v268, %v308
    %v422 = vadd.f32 %v269, %v312
    %v423 = vadd.f32 %v270, %v316
    %v424 = vadd.f32 %v271, %v320
    %v425 = vadd.f32 %v272, %v292
    %v426 = vadd.f32 %v273, %v296
    %v427 = vadd.f32 %v274, %v300
    %v428 = vadd.f32 %v275, %v304
    %v429 = vadd.f32 %v276, %v308
    %v430 = vadd.f32 %v277, %v312
    %v431 = vadd.f32 %v278, %v316
    %v432 = vadd.f32 %v279, %v320
    %v433 = vadd.f32 %v280, %v292
    %v434 = vadd.f32 %v281, %v296
    %v435 = vadd.f32 %v282, %v300
    %v436 = vadd.f32 %v283, %v304
    %v437 = vadd.f32 %v284, %v308
    %v438 = vadd.f32 %v285, %v312
    %v439 = vadd.f32 %v286, %v316
    %v440 = vadd.f32 %v287, %v320
    %v441 = vmax.f32 %v329, 0.0
    %v442 = vmax.f32 %v330, 0.0
    %v443 = vmax.f32 %v331, 0.0
    %v444 = vmax.f32 %v332, 0.0
    %v445 = vmax.f32 %v333, 0.0
    %v446 = vmax.f32 %v334, 0.0
    %v447 = vmax.f32 %v335, 0.0
    %v448 = vmax.f32 %v336, 0.0
    %v449 = vmax.f32 %v337, 0.0
    %v450 = vmax.f32 %v338, 0.0
    %v451 = vmax.f32 %v339, 0.0
    %v452 = vmax.f32 %v340, 0.0
    %v453 = vmax.f32 %v341, 0.0
    %v454 = vmax.f32 %v342, 0.0
    %v455 = vmax.f32 %v343, 0.0
    %v456 = vmax.f32 %v344, 0.0
    %v457 = vmax.f32 %v345, 0.0
    %v458 = vmax.f32 %v346, 0.0
    %v459 = vmax.f32 %v347, 0.0
    %v460 = vmax.f32 %v348, 0.0
    %v461 = vmax.f32 %v349, 0.0
    %v462 = vmax.f32 %v350, 0.0
    %v463 = vmax.f32 %v351, 0.0
    %v464 = vmax.f32 %v352, 0.0
    %v465 = vmax.f32 %v353, 0.0
    %v466 = vmax.f32 %v354, 0.0
    %v467 = vmax.f32 %v355, 0.0
    %v468 = vmax.f32 %v356, 0.0
    %v469 = vmax.f32 %v357, 0.0
    %v470 = vmax.f32 %v358, 0.0
    %v471 = vmax.f32 %v359, 0.0
    %v472 = vmax.f32 %v360, 0.0
    %v473 = vmax.f32 %v361, 0.0
    %v474 = vmax.f32 %v362, 0.0
    %v475 = vmax.f32 %v363, 0.0
    %v476 = vmax.f32 %v364, 0.0
    %v477 = vmax.f32 %v365, 0.0
    %v478 = vmax.f32 %v366, 0.0
    %v479 = vmax.f32 %v367, 0.0
    %v480 = vmax.f32 %v368, 0.0
    %v481 = vmax.f32 %v369, 0.0
    %v482 = vmax.f32 %v370, 0.0
    %v483 = vmax.f32 %v371, 0.0
    %v484 = vmax.f32 %v372, 0.0
    %v485 = vmax.f32 %v373, 0.0
    %v486 = vmax.f32 %v374, 0.0
    %v487 = vmax.f32 %v375, 0.0
    %v488 = vmax.f32 %v376, 0.0
    %v489 = vmax.f32 %v377, 0.0
    %v490 = vmax.f32 %v378, 0.0
    %v491 = vmax.f32 %v379, 0.0
    %v492 = vmax.f32 %v380, 0.0
    %v493 = vmax.f32 %v381, 0.0
    %v494 = vmax.f32 %v382, 0.0
    %v495 = vmax.f32 %v383, 0.0
    %v496 = vmax.f32 %v384, 0.0
    %v497 = vmax.f32 %v385, 0.0
    %v498 = vmax.f32 %v386, 0.0
    %v499 = vmax.f32 %v387, 0.0
    %v500 = vmax.f32 %v388, 0.0
    %v501 = vmax.f32 %v389, 0.0
    %v502 = vmax.f32 %v390, 0.0
    %v503 = vmax.f32 %v391, 0.0
    %v504 = vmax.f32 %v392, 0.0
    %v505 = vmax.f32 %v393, 0.0
    %v506 = vmax.f32 %v394, 0.0
    %v507 = vmax.f32 %v395, 0.0
    %v508 = vmax.f32 %v396, 0.0
    %v509 = vmax.f32 %v397, 0.0
    %v510 = vmax.f32 %v398, 0.0
    %v511 = vmax.f32 %v399, 0.0
    %v512 = vmax.f32 %v400, 0.0
    %v513 = vmax.f32 %v401, 0.0
    %v514 = vmax.f32 %v402, 0.0
    %v515 = vmax.f32 %v403, 0.0
    %v516 = vmax.f32 %v404, 0.0
    %v517 = vmax.f32 %v405, 0.0
    %v518 = vmax.f32 %v406, 0.0
    %v519 = vmax.f32 %v407, 0.0
    %v520 = vmax.f32 %v408, 0.0
    %v521 = vmax.f32 %v409, 0.0
    %v522 = vmax.f32 %v410, 0.0
    %v523 = vmax.f32 %v411, 0.0
    %v524 = vmax.f32 %v412, 0.0
    %v525 = vmax.f32 %v413, 0.0
    %v526 = vmax.f32 %v414, 0.0
    %v527 = vmax.f32 %v415, 0.0
    %v528 = vmax.f32 %v416, 0.0
    %v529 = vmax.f32 %v417, 0.0
    %v530 = vmax.f32 %v418, 0.0
    %v531 = vmax.f32 %v419, 0.0
    %v532 = vmax.f32 %v420, 0.0
    %v533 = vmax.f32 %v421, 0.0
    %v534 = vmax.f32 %v422, 0.0
    %v535 = vmax.f32 %v423, 0.0
    %v536 = vmax.f32 %v424, 0.0
    %v537 = vmax.f32 %v425, 0.0
    %v538 = vmax.f32 %v426, 0.0
    %v539 = vmax.f32 %v427, 0.0
    %v540 = vmax.f32 %v428, 0.0
    %v541 = vmax.f32 %v429, 0.0
    %v542 = vmax.f32 %v430, 0.0
    %v543 = vmax.f32 %v431, 0.0
    %v544 = vmax.f32 %v432, 0.0
    %v545 = vmax.f32 %v433, 0.0
    %v546 = vmax.f32 %v434, 0.0
    %v547 = vmax.f32 %v435, 0.0
    %v548 = vmax.f32 %v436, 0.0
    %v549 = vmax.f32 %v437, 0.0
    %v550 = vmax.f32 %v438, 0.0
    %v551 = vmax.f32 %v439, 0.0
    %v552 = vmax.f32 %v440, 0.0
    %vm553 = vcmask 1046528
    %v554 = vsel %vm553, %v441, 0.0
    %v555 = vsel %vm553, %v449, 0.0
    %v556 = vadd.f32 %v554, %v555
    %v557 = vsel %vm553, %v457, 0.0
    %v558 = vadd.f32 %v556, %v557
    %v559 = vsel %vm553, %v465, 0.0
    %v560 = vadd.f32 %v558, %v559
    %v561 = vsel %vm553, %v473, 0.0
    %v562 = vadd.f32 %v560, %v561
    %v563 = vsel %vm553, %v481, 0.0
    %v564 = vadd.f32 %v562, %v563
    %v565 = vsel %vm553, %v489, 0.0
    %v566 = vadd.f32 %v564, %v565
    %v567 = vsel %vm553, %v442, 0.0
    %v568 = vsel %vm553, %v450, 0.0
    %v569 = vadd.f32 %v567, %v568
    %v570 = vsel %vm553, %v458, 0.0
    %v571 = vadd.f32 %v569, %v570
    %v572 = vsel %vm553, %v466, 0.0
    %v573 = vadd.f32 %v571, %v572
    %v574 = vsel %vm553, %v474, 0.0
    %v575 = vadd.f32 %v573, %v574
    %v576 = vsel %vm553, %v482, 0.0
    %v577 = vadd.f32 %v575, %v576
    %v578 = vsel %vm553, %v490, 0.0
    %v579 = vadd.f32 %v577, %v578
    %v580 = vsel %vm553, %v443, 0.0
    %v581 = vsel %vm553, %v451, 0.0
    %v582 = vadd.f32 %v580, %v581
    %v583 = vsel %vm553, %v459, 0.0
    %v584 = vadd.f32 %v582, %v583
    %v585 = vsel %vm553, %v467, 0.0
    %v586 = vadd.f32 %v584, %v585
    %v587 = vsel %vm553, %v475, 0.0
    %v588 = vadd.f32 %v586, %v587
    %v589 = vsel %vm553, %v483, 0.0
    %v590 = vadd.f32 %v588, %v589
    %v591 = vsel %vm553, %v491, 0.0
    %v592 = vadd.f32 %v590, %v591
    %v593 = vsel %vm553, %v444, 0.0
    %v594 = vsel %vm553, %v452, 0.0
    %v595 = vadd.f32 %v593, %v594
    %v596 = vsel %vm553, %v460, 0.0
    %v597 = vadd.f32 %v595, %v596
    %v598 = vsel %vm553, %v468, 0.0
    %v599 = vadd.f32 %v597, %v598
    %v600 = vsel %vm553, %v476, 0.0
    %v601 = vadd.f32 %v599, %v600
    %v602 = vsel %vm553, %v484, 0.0
    %v603 = vadd.f32 %v601, %v602
    %v604 = vsel %vm553, %v492, 0.0
    %v605 = vadd.f32 %v603, %v604
    %v606 = vsel %vm553, %v445, 0.0
    %v607 = vsel %vm553, %v453, 0.0
    %v608 = vadd.f32 %v606, %v607
    %v609 = vsel %vm553, %v461, 0.0
    %v610 = vadd.f32 %v608, %v609
    %v611 = vsel %vm553, %v469, 0.0
    %v612 = vadd.f32 %v610, %v611
    %v613 = vsel %vm553, %v477, 0.0
    %v614 = vadd.f32 %v612, %v613
    %v615 = vsel %vm553, %v485, 0.0
    %v616 = vadd.f32 %v614, %v615
    %v617 = vsel %vm553, %v493, 0.0
    %v618 = vadd.f32 %v616, %v617
    %v619 = vsel %vm553, %v446, 0.0
    %v620 = vsel %vm553, %v454, 0.0
    %v621 = vadd.f32 %v619, %v620
    %v622 = vsel %vm553, %v462, 0.0
    %v623 = vadd.f32 %v621, %v622
    %v624 = vsel %vm553, %v470, 0.0
    %v625 = vadd.f32 %v623, %v624
    %v626 = vsel %vm553, %v478, 0.0
    %v627 = vadd.f32 %v625, %v626
    %v628 = vsel %vm553, %v486, 0.0
    %v629 = vadd.f32 %v627, %v628
    %v630 = vsel %vm553, %v494, 0.0
    %v631 = vadd.f32 %v629, %v630
    %v632 = vsel %vm553, %v447, 0.0
    %v633 = vsel %vm553, %v455, 0.0
    %v634 = vadd.f32 %v632, %v633
    %v635 = vsel %vm553, %v463, 0.0
    %v636 = vadd.f32 %v634, %v635
    %v637 = vsel %vm553, %v471, 0.0
    %v638 = vadd.f32 %v636, %v637
    %v639 = vsel %vm553, %v479, 0.0
    %v640 = vadd.f32 %v638, %v639
    %v641 = vsel %vm553, %v487, 0.0
    %v642 = vadd.f32 %v640, %v641
    %v643 = vsel %vm553, %v495, 0.0
    %v644 = vadd.f32 %v642, %v643
    %v645 = vsel %vm553, %v448, 0.0
    %v646 = vsel %vm553, %v456, 0.0
    %v647 = vadd.f32 %v645, %v646
    %v648 = vsel %vm553, %v464, 0.0
    %v649 = vadd.f32 %v647, %v648
    %v650 = vsel %vm553, %v472, 0.0
    %v651 = vadd.f32 %v649, %v650
    %v652 = vsel %vm553, %v480, 0.0
    %v653 = vadd.f32 %v651, %v652
    %v654 = vsel %vm553, %v488, 0.0
    %v655 = vadd.f32 %v653, %v654
    %v656 = vsel %vm553, %v496, 0.0
    %v657 = vadd.f32 %v655, %v656
    %v658 = vsel %vm553, %v497, 0.0
    %v659 = vsel %vm553, %v505, 0.0
    %v660 = vadd.f32 %v658, %v659
    %v661 = vsel %vm553, %v513, 0.0
    %v662 = vadd.f32 %v660, %v661
    %v663 = vsel %vm553, %v521, 0.0
    %v664 = vadd.f32 %v662, %v663
    %v665 = vsel %vm553, %v529, 0.0
    %v666 = vadd.f32 %v664, %v665
    %v667 = vsel %vm553, %v537, 0.0
    %v668 = vadd.f32 %v666, %v667
    %v669 = vsel %vm553, %v545, 0.0
    %v670 = vadd.f32 %v668, %v669
    %v671 = vsel %vm553, %v498, 0.0
    %v672 = vsel %vm553, %v506, 0.0
    %v673 = vadd.f32 %v671, %v672
    %v674 = vsel %vm553, %v514, 0.0
    %v675 = vadd.f32 %v673, %v674
    %v676 = vsel %vm553, %v522, 0.0
    %v677 = vadd.f32 %v675, %v676
    %v678 = vsel %vm553, %v530, 0.0
    %v679 = vadd.f32 %v677, %v678
    %v680 = vsel %vm553, %v538, 0.0
    %v681 = vadd.f32 %v679, %v680
    %v682 = vsel %vm553, %v546, 0.0
    %v683 = vadd.f32 %v681, %v682
    %v684 = vsel %vm553, %v499, 0.0
    %v685 = vsel %vm553, %v507, 0.0
    %v686 = vadd.f32 %v684, %v685
    %v687 = vsel %vm553, %v515, 0.0
    %v688 = vadd.f32 %v686, %v687
    %v689 = vsel %vm553, %v523, 0.0
    %v690 = vadd.f32 %v688, %v689
    %v691 = vsel %vm553, %v531, 0.0
    %v692 = vadd.f32 %v690, %v691
    %v693 = vsel %vm553, %v539, 0.0
    %v694 = vadd.f32 %v692, %v693
    %v695 = vsel %vm553, %v547, 0.0
    %v696 = vadd.f32 %v694, %v695
    %v697 = vsel %vm553, %v500, 0.0
    %v698 = vsel %vm553, %v508, 0.0
    %v699 = vadd.f32 %v697, %v698
    %v700 = vsel %vm553, %v516, 0.0
    %v701 = vadd.f32 %v699, %v700
    %v702 = vsel %vm553, %v524, 0.0
    %v703 = vadd.f32 %v701, %v702
    %v704 = vsel %vm553, %v532, 0.0
    %v705 = vadd.f32 %v703, %v704
    %v706 = vsel %vm553, %v540, 0.0
    %v707 = vadd.f32 %v705, %v706
    %v708 = vsel %vm553, %v548, 0.0
    %v709 = vadd.f32 %v707, %v708
    %v710 = vsel %vm553, %v501, 0.0
    %v711 = vsel %vm553, %v509, 0.0
    %v712 = vadd.f32 %v710, %v711
    %v713 = vsel %vm553, %v517, 0.0
    %v714 = vadd.f32 %v712, %v713
    %v715 = vsel %vm553, %v525, 0.0
    %v716 = vadd.f32 %v714, %v715
    %v717 = vsel %vm553, %v533, 0.0
    %v718 = vadd.f32 %v716, %v717
    %v719 = vsel %vm553, %v541, 0.0
    %v720 = vadd.f32 %v718, %v719
    %v721 = vsel %vm553, %v549, 0.0
    %v722 = vadd.f32 %v720, %v721
    %v723 = vsel %vm553, %v502, 0.0
    %v724 = vsel %vm553, %v510, 0.0
    %v725 = vadd.f32 %v723, %v724
    %v726 = vsel %vm553, %v518, 0.0
    %v727 = vadd.f32 %v725, %v726
    %v728 = vsel %vm553, %v526, 0.0
    %v729 = vadd.f32 %v727, %v728
    %v730 = vsel %vm553, %v534, 0.0
    %v731 = vadd.f32 %v729, %v730
    %v732 = vsel %vm553, %v542, 0.0
    %v733 = vadd.f32 %v731, %v732
    %v734 = vsel %vm553, %v550, 0.0
    %v735 = vadd.f32 %v733, %v734
    %v736 = vsel %vm553, %v503, 0.0
    %v737 = vsel %vm553, %v511, 0.0
    %v738 = vadd.f32 %v736, %v737
    %v739 = vsel %vm553, %v519, 0.0
    %v740 = vadd.f32 %v738, %v739
    %v741 = vsel %vm553, %v527, 0.0
    %v742 = vadd.f32 %v740, %v741
    %v743 = vsel %vm553, %v535, 0.0
    %v744 = vadd.f32 %v742, %v743
    %v745 = vsel %vm553, %v543, 0.0
    %v746 = vadd.f32 %v744, %v745
    %v747 = vsel %vm553, %v551, 0.0
    %v748 = vadd.f32 %v746, %v747
    %v749 = vsel %vm553, %v504, 0.0
    %v750 = vsel %vm553, %v512, 0.0
    %v751 = vadd.f32 %v749, %v750
    %v752 = vsel %vm553, %v520, 0.0
    %v753 = vadd.f32 %v751, %v752
    %v754 = vsel %vm553, %v528, 0.0
    %v755 = vadd.f32 %v753, %v754
    %v756 = vsel %vm553, %v536, 0.0
    %v757 = vadd.f32 %v755, %v756
    %v758 = vsel %vm553, %v544, 0.0
    %v759 = vadd.f32 %v757, %v758
    %v760 = vsel %vm553, %v552, 0.0
    %v761 = vadd.f32 %v759, %v760
    %v762 = vsel %vm553, %v566, 0.0
    %v763 = vrot.slane %v762, 4
    %v764 = vadd.f32 %v762, %v763
    %v765 = vrot.slane %v764, 2
    %v766 = vadd.f32 %v764, %v765
    %v767 = vrot.slane %v766, 1
    %v768 = vadd.f32 %v766, %v767
    %v769 = vsel %vm553, %v579, 0.0
    %v770 = vrot.slane %v769, 4
    %v771 = vadd.f32 %v769, %v770
    %v772 = vrot.slane %v771, 2
    %v773 = vadd.f32 %v771, %v772
    %v774 = vrot.slane %v773, 1
    %v775 = vadd.f32 %v773, %v774
    %v776 = vsel %vm553, %v592, 0.0
    %v777 = vrot.slane %v776, 4
    %v778 = vadd.f32 %v776, %v777
    %v779 = vrot.slane %v778, 2
    %v780 = vadd.f32 %v778, %v779
    %v781 = vrot.slane %v780, 1
    %v782 = vadd.f32 %v780, %v781
    %v783 = vsel %vm553, %v605, 0.0
    %v784 = vrot.slane %v783, 4
    %v785 = vadd.f32 %v783, %v784
    %v786 = vrot.slane %v785, 2
    %v787 = vadd.f32 %v785, %v786
    %v788 = vrot.slane %v787, 1
    %v789 = vadd.f32 %v787, %v788
    %v790 = vsel %vm553, %v618, 0.0
    %v791 = vrot.slane %v790, 4
    %v792 = vadd.f32 %v790, %v791
    %v793 = vrot.slane %v792, 2
    %v794 = vadd.f32 %v792, %v793
    %v795 = vrot.slane %v794, 1
    %v796 = vadd.f32 %v794, %v795
    %v797 = vsel %vm553, %v631, 0.0
    %v798 = vrot.slane %v797, 4
    %v799 = vadd.f32 %v797, %v798
    %v800 = vrot.slane %v799, 2
    %v801 = vadd.f32 %v799, %v800
    %v802 = vrot.slane %v801, 1
    %v803 = vadd.f32 %v801, %v802
    %v804 = vsel %vm553, %v644, 0.0
    %v805 = vrot.slane %v804, 4
    %v806 = vadd.f32 %v804, %v805
    %v807 = vrot.slane %v806, 2
    %v808 = vadd.f32 %v806, %v807
    %v809 = vrot.slane %v808, 1
    %v810 = vadd.f32 %v808, %v809
    %v811 = vsel %vm553, %v657, 0.0
    %v812 = vrot.slane %v811, 4
    %v813 = vadd.f32 %v811, %v812
    %v814 = vrot.slane %v813, 2
    %v815 = vadd.f32 %v813, %v814
    %v816 = vrot.slane %v815, 1
    %v817 = vadd.f32 %v815, %v816
    %v818 = vsel %vm553, %v670, 0.0
    %v819 = vrot.slane %v818, 4
    %v820 = vadd.f32 %v818, %v819
    %v821 = vrot.slane %v820, 2
    %v822 = vadd.f32 %v820, %v821
    %v823 = vrot.slane %v822, 1
    %v824 = vadd.f32 %v822, %v823
    %v825 = vsel %vm553, %v683, 0.0
    %v826 = vrot.slane %v825, 4
    %v827 = vadd.f32 %v825, %v826
    %v828 = vrot.slane %v827, 2
    %v829 = vadd.f32 %v827, %v828
    %v830 = vrot.slane %v829, 1
    %v831 = vadd.f32 %v829, %v830
    %v832 = vsel %vm553, %v696, 0.0
    %v833 = vrot.slane %v832, 4
    %v834 = vadd.f32 %v832, %v833
    %v835 = vrot.slane %v834, 2
    %v836 = vadd.f32 %v834, %v835
    %v837 = vrot.slane %v836, 1
    %v838 = vadd.f32 %v836, %v837
    %v839 = vsel %vm553, %v709, 0.0
    %v840 = vrot.slane %v839, 4
    %v841 = vadd.f32 %v839, %v840
    %v842 = vrot.slane %v841, 2
    %v843 = vadd.f32 %v841, %v842
    %v844 = vrot.slane %v843, 1
    %v845 = vadd.f32 %v843, %v844
    %v846 = vsel %vm553, %v722, 0.0
    %v847 = vrot.slane %v846, 4
    %v848 = vadd.f32 %v846, %v847
    %v849 = vrot.slane %v848, 2
    %v850 = vadd.f32 %v848, %v849
    %v851 = vrot.slane %v850, 1
    %v852 = vadd.f32 %v850, %v851
    %v853 = vsel %vm553, %v735, 0.0
    %v854 = vrot.slane %v853, 4
    %v855 = vadd.f32 %v853, %v854
    %v856 = vrot.slane %v855, 2
    %v857 = vadd.f32 %v855, %v856
    %v858 = vrot.slane %v857, 1
    %v859 = vadd.f32 %v857, %v858
    %v860 = vsel %vm553, %v748, 0.0
    %v861 = vrot.slane %v860, 4
    %v862 = vadd.f32 %v860, %v861
    %v863 = vrot.slane %v862, 2
    %v864 = vadd.f32 %v862, %v863
    %v865 = vrot.slane %v864, 1
    %v866 = vadd.f32 %v864, %v865
    %v867 = vsel %vm553, %v761, 0.0
    %v868 = vrot.slane %v867, 4
    %v869 = vadd.f32 %v867, %v868
    %v870 = vrot.slane %v869, 2
    %v871 = vadd.f32 %v869, %v870
    %v872 = vrot.slane %v871, 1
    %v873 = vadd.f32 %v871, %v872
    %v874 = vmul.f32 %v768, 0.020408163
    %v875 = vmul.f32 %v775, 0.020408163
    %v876 = vmul.f32 %v782, 0.020408163
    %v877 = vmul.f32 %v789, 0.020408163
    %v878 = vmul.f32 %v796, 0.020408163
    %v879 = vmul.f32 %v803, 0.020408163
    %v880 = vmul.f32 %v810, 0.020408163
    %v881 = vmul.f32 %v817, 0.020408163
    %v882 = vmul.f32 %v824, 0.020408163
    %v883 = vmul.f32 %v831, 0.020408163
    %v884 = vmul.f32 %v838, 0.020408163
    %v885 = vmul.f32 %v845, 0.020408163
    %v886 = vmul.f32 %v852, 0.020408163
    %v887 = vmul.f32 %v859, 0.020408163
    %v888 = vmul.f32 %v866, 0.020408163
    %v889 = vmul.f32 %v873, 0.020408163
    %v890 = vld [vmem:[%s3] sm:$0xff]
    %v891 = vld [vmem:[%s3 + $0x8] sm:$0xff]
    %v892 = vld [vmem:[%s3 + $0x10] sm:$0xff]
    %v893 = vld [vmem:[%s3 + $0x18] sm:$0xff]
    %v894 = vld [vmem:[%s3 + $0x20] sm:$0xff]
    %v895 = vld [vmem:[%s3 + $0x28] sm:$0xff]
    %v896 = vld [vmem:[%s3 + $0x30] sm:$0xff]
    %v897 = vld [vmem:[%s3 + $0x38] sm:$0xff]
    %v898 = vld [vmem:[%s3 + $0x40] sm:$0xff]
    %v899 = vld [vmem:[%s3 + $0x48] sm:$0xff]
    %v900 = vld [vmem:[%s3 + $0x50] sm:$0xff]
    %v901 = vld [vmem:[%s3 + $0x58] sm:$0xff]
    %v902 = vld [vmem:[%s3 + $0x60] sm:$0xff]
    %v903 = vld [vmem:[%s3 + $0x68] sm:$0xff]
    %v904 = vld [vmem:[%s3 + $0x70] sm:$0xff]
    %v905 = vld [vmem:[%s3 + $0x78] sm:$0xff]
    %v906 = vld [vmem:[%s3 + $0x80] sm:$0xff]
    %v907 = vld [vmem:[%s3 + $0x88] sm:$0xff]
    %v908 = vld [vmem:[%s3 + $0x90] sm:$0xff]
    %v909 = vld [vmem:[%s3 + $0x98] sm:$0xff]
    %v910 = vld [vmem:[%s3 + $0xa0] sm:$0xff]
    %v911 = vld [vmem:[%s3 + $0xa8] sm:$0xff]
    %v912 = vld [vmem:[%s3 + $0xb0] sm:$0xff]
    %v913 = vld [vmem:[%s3 + $0xb8] sm:$0xff]
    %v914 = vld [vmem:[%s3 + $0xc0] sm:$0xff]
    %v915 = vld [vmem:[%s3 + $0xc8] sm:$0xff]
    %v916 = vld [vmem:[%s3 + $0xd0] sm:$0xff]
    %v917 = vld [vmem:[%s3 + $0xd8] sm:$0xff]
    %v918 = vld [vmem:[%s3 + $0xe0] sm:$0xff]
    %v919 = vld [vmem:[%s3 + $0xe8] sm:$0xff]
    %v920 = vld [vmem:[%s3 + $0xf0] sm:$0xff]
    %v921 = vld [vmem:[%s3 + $0xf8] sm:$0xff]
    %v922 = vld [vmem:[%s3 + $0x100] sm:$0xff]
    %v923 = vld [vmem:[%s3 + $0x108] sm:$0xff]
    %v924 = vld [vmem:[%s3 + $0x110] sm:$0xff]
    %v925 = vld [vmem:[%s3 + $0x118] sm:$0xff]
    %v926 = vld [vmem:[%s3 + $0x120] sm:$0xff]
    %v927 = vld [vmem:[%s3 + $0x128] sm:$0xff]
    %v928 = vld [vmem:[%s3 + $0x130] sm:$0xff]
    %v929 = vld [vmem:[%s3 + $0x138] sm:$0xff]
    %v930 = vld [vmem:[%s3 + $0x140] sm:$0xff]
    %v931 = vld [vmem:[%s3 + $0x148] sm:$0xff]
    %v932 = vld [vmem:[%s3 + $0x150] sm:$0xff]
    %v933 = vld [vmem:[%s3 + $0x158] sm:$0xff]
    %v934 = vld [vmem:[%s3 + $0x160] sm:$0xff]
    %v935 = vld [vmem:[%s3 + $0x168] sm:$0xff]
    %v936 = vld [vmem:[%s3 + $0x170] sm:$0xff]
    %v937 = vld [vmem:[%s3 + $0x178] sm:$0xff]
    %v938 = vld [vmem:[%s3 + $0x180] sm:$0xff]
    %v939 = vld [vmem:[%s3 + $0x188] sm:$0xff]
    %v940 = vld [vmem:[%s3 + $0x190] sm:$0xff]
    %v941 = vld [vmem:[%s3 + $0x198] sm:$0xff]
    %v942 = vld [vmem:[%s3 + $0x1a0] sm:$0xff]
    %v943 = vld [vmem:[%s3 + $0x1a8] sm:$0xff]
    %v944 = vld [vmem:[%s3 + $0x1b0] sm:$0xff]
    %v945 = vld [vmem:[%s3 + $0x1b8] sm:$0xff]
    %v946 = vld [vmem:[%s3 + $0x1c0] sm:$0xff]
    %v947 = vld [vmem:[%s3 + $0x1c8] sm:$0xff]
    %v948 = vld [vmem:[%s3 + $0x1d0] sm:$0xff]
    %v949 = vld [vmem:[%s3 + $0x1d8] sm:$0xff]
    %v950 = vld [vmem:[%s3 + $0x1e0] sm:$0xff]
    %v951 = vld [vmem:[%s3 + $0x1e8] sm:$0xff]
    %v952 = vld [vmem:[%s3 + $0x1f0] sm:$0xff]
    %v953 = vld [vmem:[%s3 + $0x1f8] sm:$0xff]
    %v954 = vld [vmem:[%s3 + $0x200] sm:$0xff]
    %v955 = vld [vmem:[%s3 + $0x208] sm:$0xff]
    %v956 = vld [vmem:[%s3 + $0x210] sm:$0xff]
    %v957 = vld [vmem:[%s3 + $0x218] sm:$0xff]
    %v958 = vld [vmem:[%s3 + $0x220] sm:$0xff]
    %v959 = vld [vmem:[%s3 + $0x228] sm:$0xff]
    %v960 = vld [vmem:[%s3 + $0x230] sm:$0xff]
    %v961 = vld [vmem:[%s3 + $0x238] sm:$0xff]
    %v962 = vld [vmem:[%s3 + $0x240] sm:$0xff]
    %v963 = vld [vmem:[%s3 + $0x248] sm:$0xff]
    %v964 = vld [vmem:[%s3 + $0x250] sm:$0xff]
    %v965 = vld [vmem:[%s3 + $0x258] sm:$0xff]
    %v966 = vld [vmem:[%s3 + $0x260] sm:$0xff]
    %v967 = vld [vmem:[%s3 + $0x268] sm:$0xff]
    %v968 = vld [vmem:[%s3 + $0x270] sm:$0xff]
    %v969 = vld [vmem:[%s3 + $0x278] sm:$0xff]
    %v970 = vld [vmem:[%s3 + $0x280] sm:$0xff]
    %v971 = vld [vmem:[%s3 + $0x288] sm:$0xff]
    %v972 = vld [vmem:[%s3 + $0x290] sm:$0xff]
    %v973 = vld [vmem:[%s3 + $0x298] sm:$0xff]
    %v974 = vld [vmem:[%s3 + $0x2a0] sm:$0xff]
    %v975 = vld [vmem:[%s3 + $0x2a8] sm:$0xff]
    %v976 = vld [vmem:[%s3 + $0x2b0] sm:$0xff]
    %v977 = vld [vmem:[%s3 + $0x2b8] sm:$0xff]
    %v978 = vld [vmem:[%s3 + $0x2c0] sm:$0xff]
    %v979 = vld [vmem:[%s3 + $0x2c8] sm:$0xff]
    %v980 = vld [vmem:[%s3 + $0x2d0] sm:$0xff]
    %v981 = vld [vmem:[%s3 + $0x2d8] sm:$0xff]
    %v982 = vld [vmem:[%s3 + $0x2e0] sm:$0xff]
    %v983 = vld [vmem:[%s3 + $0x2e8] sm:$0xff]
    %v984 = vld [vmem:[%s3 + $0x2f0] sm:$0xff]
    %v985 = vld [vmem:[%s3 + $0x2f8] sm:$0xff]
    %v986 = vld [vmem:[%s3 + $0x300] sm:$0xff]
    %v987 = vld [vmem:[%s3 + $0x308] sm:$0xff]
    %v988 = vld [vmem:[%s3 + $0x310] sm:$0xff]
    %v989 = vld [vmem:[%s3 + $0x318] sm:$0xff]
    %v990 = vld [vmem:[%s3 + $0x320] sm:$0xff]
    %v991 = vld [vmem:[%s3 + $0x328] sm:$0xff]
    %v992 = vld [vmem:[%s3 + $0x330] sm:$0xff]
    %v993 = vld [vmem:[%s3 + $0x338] sm:$0xff]
    %v994 = vld [vmem:[%s3 + $0x340] sm:$0xff]
    %v995 = vld [vmem:[%s3 + $0x348] sm:$0xff]
    %v996 = vld [vmem:[%s3 + $0x350] sm:$0xff]
    %v997 = vld [vmem:[%s3 + $0x358] sm:$0xff]
    %v998 = vld [vmem:[%s3 + $0x360] sm:$0xff]
    %v999 = vld [vmem:[%s3 + $0x368] sm:$0xff]
    %v1000 = vld [vmem:[%s3 + $0x370] sm:$0xff]
    %v1001 = vld [vmem:[%s3 + $0x378] sm:$0xff]
    %v1002 = vld [vmem:[%s3 + $0x380] sm:$0xff]
    %v1003 = vld [vmem:[%s3 + $0x388] sm:$0xff]
    %v1004 = vld [vmem:[%s3 + $0x390] sm:$0xff]
    %v1005 = vld [vmem:[%s3 + $0x398] sm:$0xff]
    %v1006 = vld [vmem:[%s3 + $0x3a0] sm:$0xff]
    %v1007 = vld [vmem:[%s3 + $0x3a8] sm:$0xff]
    %v1008 = vld [vmem:[%s3 + $0x3b0] sm:$0xff]
    %v1009 = vld [vmem:[%s3 + $0x3b8] sm:$0xff]
    %v1010 = vld [vmem:[%s3 + $0x3c0] sm:$0xff]
    %v1011 = vld [vmem:[%s3 + $0x3c8] sm:$0xff]
    %v1012 = vld [vmem:[%s3 + $0x3d0] sm:$0xff]
    %v1013 = vld [vmem:[%s3 + $0x3d8] sm:$0xff]
    %v1014 = vld [vmem:[%s3 + $0x3e0] sm:$0xff]
    %v1015 = vld [vmem:[%s3 + $0x3e8] sm:$0xff]
    %v1016 = vld [vmem:[%s3 + $0x3f0] sm:$0xff]
    %v1017 = vld [vmem:[%s3 + $0x3f8] sm:$0xff]
    %v1018 = vld [vmem:[%s4] sm:$0x1]
    %v1020 = vlaneseq
    %v1021 = vshrl.u32 %v1020, 7
    %v1022 = vsub.s32 0, %v1021
    %v1023 = vrot.slane %v1018, %v1022
    %vm1041 = vcmask 1041409
    %v1042 = vsel %vm1041, %v882, %v874
    %v1043 = vsel %vm1041, %v883, %v875
    %v1044 = vsel %vm1041, %v884, %v876
    %v1045 = vsel %vm1041, %v885, %v877
    %v1046 = vsel %vm1041, %v886, %v878
    %v1047 = vsel %vm1041, %v887, %v879
    %v1048 = vsel %vm1041, %v888, %v880
    %v1049 = vsel %vm1041, %v889, %v881
    %1058 = vmatprep.subr.mxu0 0.0
    %1059 = vmatpush1.msra.mxu0 %v890
    %1060 = vmatprep.subr.mxu0 0.0
    %1061 = vmatpush1.msra.mxu0 %v891
    %1062 = vmatprep.subr.mxu0 0.0
    %1063 = vmatpush1.msra.mxu0 %v892
    %1064 = vmatprep.subr.mxu0 0.0
    %1065 = vmatpush1.msra.mxu0 %v893
    %1066 = vmatprep.subr.mxu0 0.0
    %1067 = vmatpush1.msra.mxu0 %v894
    %1068 = vmatprep.subr.mxu0 0.0
    %1069 = vmatpush1.msra.mxu0 %v895
    %1070 = vmatprep.subr.mxu0 0.0
    %1071 = vmatpush1.msra.mxu0 %v896
    %1072 = vmatprep.subr.mxu0 0.0
    %1073 = vmatpush1.msra.mxu0 %v897
    %1074 = vmatprep.subr.mxu0 0.0
    %1075 = vmatpush1.msra.mxu0 %v898
    %1076 = vmatprep.subr.mxu0 0.0
    %1077 = vmatpush1.msra.mxu0 %v899
    %1078 = vmatprep.subr.mxu0 0.0
    %1079 = vmatpush1.msra.mxu0 %v900
    %1080 = vmatprep.subr.mxu0 0.0
    %1081 = vmatpush1.msra.mxu0 %v901
    %1082 = vmatprep.subr.mxu0 0.0
    %1083 = vmatpush1.msra.mxu0 %v902
    %1084 = vmatprep.subr.mxu0 0.0
    %1085 = vmatpush1.msra.mxu0 %v903
    %1086 = vmatprep.subr.mxu0 0.0
    %1087 = vmatpush1.msra.mxu0 %v904
    %1088 = vmatprep.subr.mxu0 0.0
    %1089 = vmatpush1.msra.mxu0 %v905
    %1090 = vmatprep.subr.mxu0 0.0
    %1091 = vmatpush1.msra.mxu0 %v906
    %1092 = vmatprep.subr.mxu0 0.0
    %1093 = vmatpush1.msra.mxu0 %v907
    %1094 = vmatprep.subr.mxu0 0.0
    %1095 = vmatpush1.msra.mxu0 %v908
    %1096 = vmatprep.subr.mxu0 0.0
    %1097 = vmatpush1.msra.mxu0 %v909
    %1098 = vmatprep.subr.mxu0 0.0
    %1099 = vmatpush1.msra.mxu0 %v910
    %1100 = vmatprep.subr.mxu0 0.0
    %1101 = vmatpush1.msra.mxu0 %v911
    %1102 = vmatprep.subr.mxu0 0.0
    %1103 = vmatpush1.msra.mxu0 %v912
    %1104 = vmatprep.subr.mxu0 0.0
    %1105 = vmatpush1.msra.mxu0 %v913
    %1106 = vmatprep.subr.mxu0 0.0
    %1107 = vmatpush1.msra.mxu0 %v914
    %1108 = vmatprep.subr.mxu0 0.0
    %1109 = vmatpush1.msra.mxu0 %v915
    %1110 = vmatprep.subr.mxu0 0.0
    %1111 = vmatpush1.msra.mxu0 %v916
    %1112 = vmatprep.subr.mxu0 0.0
    %1113 = vmatpush1.msra.mxu0 %v917
    %1114 = vmatprep.subr.mxu0 0.0
    %1115 = vmatpush1.msra.mxu0 %v918
    %1116 = vmatprep.subr.mxu0 0.0
    %1117 = vmatpush1.msra.mxu0 %v919
    %1118 = vmatprep.subr.mxu0 0.0
    %1119 = vmatpush1.msra.mxu0 %v920
    %1120 = vmatprep.subr.mxu0 0.0
    %1121 = vmatpush1.msra.mxu0 %v921
    %1122 = vmatprep.mubr.f32.mxu0 %v1043
    %1123 = vmatmul.mubr.f32.gmra.mrb[0].mxu0 %v1042
    %v1124 = vpop.f32.mrb[0].mxu0
    %v1125 = vadd.f32 %v1023, %v1124
    %v1126 = vpop.f32.mrb[0].mxu0
    %1127 = vdwg.mxu0
    %1128 = vmatprep.subr.mxu0 0.0
    %1129 = vmatpush1.msra.mxu0 %v922
    %1130 = vmatprep.subr.mxu0 0.0
    %1131 = vmatpush1.msra.mxu0 %v923
    %1132 = vmatprep.subr.mxu0 0.0
    %1133 = vmatpush1.msra.mxu0 %v924
    %1134 = vmatprep.subr.mxu0 0.0
    %1135 = vmatpush1.msra.mxu0 %v925
    %1136 = vmatprep.subr.mxu0 0.0
    %1137 = vmatpush1.msra.mxu0 %v926
    %1138 = vmatprep.subr.mxu0 0.0
    %1139 = vmatpush1.msra.mxu0 %v927
    %1140 = vmatprep.subr.mxu0 0.0
    %1141 = vmatpush1.msra.mxu0 %v928
    %1142 = vmatprep.subr.mxu0 0.0
    %1143 = vmatpush1.msra.mxu0 %v929
    %1144 = vmatprep.subr.mxu0 0.0
    %1145 = vmatpush1.msra.mxu0 %v930
    %1146 = vmatprep.subr.mxu0 0.0
    %1147 = vmatpush1.msra.mxu0 %v931
    %1148 = vmatprep.subr.mxu0 0.0
    %1149 = vmatpush1.msra.mxu0 %v932
    %1150 = vmatprep.subr.mxu0 0.0
    %1151 = vmatpush1.msra.mxu0 %v933
    %1152 = vmatprep.subr.mxu0 0.0
    %1153 = vmatpush1.msra.mxu0 %v934
    %1154 = vmatprep.subr.mxu0 0.0
    %1155 = vmatpush1.msra.mxu0 %v935
    %1156 = vmatprep.subr.mxu0 0.0
    %1157 = vmatpush1.msra.mxu0 %v936
    %1158 = vmatprep.subr.mxu0 0.0
    %1159 = vmatpush1.msra.mxu0 %v937
    %1160 = vmatprep.subr.mxu0 0.0
    %1161 = vmatpush1.msra.mxu0 %v938
    %1162 = vmatprep.subr.mxu0 0.0
    %1163 = vmatpush1.msra.mxu0 %v939
    %1164 = vmatprep.subr.mxu0 0.0
    %1165 = vmatpush1.msra.mxu0 %v940
    %1166 = vmatprep.subr.mxu0 0.0
    %1167 = vmatpush1.msra.mxu0 %v941
    %1168 = vmatprep.subr.mxu0 0.0
    %1169 = vmatpush1.msra.mxu0 %v942
    %1170 = vmatprep.subr.mxu0 0.0
    %1171 = vmatpush1.msra.mxu0 %v943
    %1172 = vmatprep.subr.mxu0 0.0
    %1173 = vmatpush1.msra.mxu0 %v944
    %1174 = vmatprep.subr.mxu0 0.0
    %1175 = vmatpush1.msra.mxu0 %v945
    %1176 = vmatprep.subr.mxu0 0.0
    %1177 = vmatpush1.msra.mxu0 %v946
    %1178 = vmatprep.subr.mxu0 0.0
    %1179 = vmatpush1.msra.mxu0 %v947
    %1180 = vmatprep.subr.mxu0 0.0
    %1181 = vmatpush1.msra.mxu0 %v948
    %1182 = vmatprep.subr.mxu0 0.0
    %1183 = vmatpush1.msra.mxu0 %v949
    %1184 = vmatprep.subr.mxu0 0.0
    %1185 = vmatpush1.msra.mxu0 %v950
    %1186 = vmatprep.subr.mxu0 0.0
    %1187 = vmatpush1.msra.mxu0 %v951
    %1188 = vmatprep.subr.mxu0 0.0
    %1189 = vmatpush1.msra.mxu0 %v952
    %1190 = vmatprep.subr.mxu0 0.0
    %1191 = vmatpush1.msra.mxu0 %v953
    %1192 = vmatprep.mubr.f32.mxu0 %v1045
    %1193 = vmatmul.mubr.f32.gmra.mrb[0].mxu0 %v1044
    %v1194 = vpop.f32.mrb[0].mxu0
    %v1195 = vadd.f32 %v1125, %v1194
    %v1196 = vpop.f32.mrb[0].mxu0
    %1197 = vdwg.mxu0
    %1198 = vmatprep.subr.mxu0 0.0
    %1199 = vmatpush1.msra.mxu0 %v954
    %1200 = vmatprep.subr.mxu0 0.0
    %1201 = vmatpush1.msra.mxu0 %v955
    %1202 = vmatprep.subr.mxu0 0.0
    %1203 = vmatpush1.msra.mxu0 %v956
    %1204 = vmatprep.subr.mxu0 0.0
    %1205 = vmatpush1.msra.mxu0 %v957
    %1206 = vmatprep.subr.mxu0 0.0
    %1207 = vmatpush1.msra.mxu0 %v958
    %1208 = vmatprep.subr.mxu0 0.0
    %1209 = vmatpush1.msra.mxu0 %v959
    %1210 = vmatprep.subr.mxu0 0.0
    %1211 = vmatpush1.msra.mxu0 %v960
    %1212 = vmatprep.subr.mxu0 0.0
    %1213 = vmatpush1.msra.mxu0 %v961
    %1214 = vmatprep.subr.mxu0 0.0
    %1215 = vmatpush1.msra.mxu0 %v962
    %1216 = vmatprep.subr.mxu0 0.0
    %1217 = vmatpush1.msra.mxu0 %v963
    %1218 = vmatprep.subr.mxu0 0.0
    %1219 = vmatpush1.msra.mxu0 %v964
    %1220 = vmatprep.subr.mxu0 0.0
    %1221 = vmatpush1.msra.mxu0 %v965
    %1222 = vmatprep.subr.mxu0 0.0
    %1223 = vmatpush1.msra.mxu0 %v966
    %1224 = vmatprep.subr.mxu0 0.0
    %1225 = vmatpush1.msra.mxu0 %v967
    %1226 = vmatprep.subr.mxu0 0.0
    %1227 = vmatpush1.msra.mxu0 %v968
    %1228 = vmatprep.subr.mxu0 0.0
    %1229 = vmatpush1.msra.mxu0 %v969
    %1230 = vmatprep.subr.mxu0 0.0
    %1231 = vmatpush1.msra.mxu0 %v970
    %1232 = vmatprep.subr.mxu0 0.0
    %1233 = vmatpush1.msra.mxu0 %v971
    %1234 = vmatprep.subr.mxu0 0.0
    %1235 = vmatpush1.msra.mxu0 %v972
    %1236 = vmatprep.subr.mxu0 0.0
    %1237 = vmatpush1.msra.mxu0 %v973
    %1238 = vmatprep.subr.mxu0 0.0
    %1239 = vmatpush1.msra.mxu0 %v974
    %1240 = vmatprep.subr.mxu0 0.0
    %1241 = vmatpush1.msra.mxu0 %v975
    %1242 = vmatprep.subr.mxu0 0.0
    %1243 = vmatpush1.msra.mxu0 %v976
    %1244 = vmatprep.subr.mxu0 0.0
    %1245 = vmatpush1.msra.mxu0 %v977
    %1246 = vmatprep.subr.mxu0 0.0
    %1247 = vmatpush1.msra.mxu0 %v978
    %1248 = vmatprep.subr.mxu0 0.0
    %1249 = vmatpush1.msra.mxu0 %v979
    %1250 = vmatprep.subr.mxu0 0.0
    %1251 = vmatpush1.msra.mxu0 %v980
    %1252 = vmatprep.subr.mxu0 0.0
    %1253 = vmatpush1.msra.mxu0 %v981
    %1254 = vmatprep.subr.mxu0 0.0
    %1255 = vmatpush1.msra.mxu0 %v982
    %1256 = vmatprep.subr.mxu0 0.0
    %1257 = vmatpush1.msra.mxu0 %v983
    %1258 = vmatprep.subr.mxu0 0.0
    %1259 = vmatpush1.msra.mxu0 %v984
    %1260 = vmatprep.subr.mxu0 0.0
    %1261 = vmatpush1.msra.mxu0 %v985
    %1262 = vmatprep.mubr.f32.mxu0 %v1047
    %1263 = vmatmul.mubr.f32.gmra.mrb[0].mxu0 %v1046
    %v1264 = vpop.f32.mrb[0].mxu0
    %v1265 = vadd.f32 %v1195, %v1264
    %v1266 = vpop.f32.mrb[0].mxu0
    %1267 = vdwg.mxu0
    %1268 = vmatprep.subr.mxu0 0.0
    %1269 = vmatpush1.msra.mxu0 %v986
    %1270 = vmatprep.subr.mxu0 0.0
    %1271 = vmatpush1.msra.mxu0 %v987
    %1272 = vmatprep.subr.mxu0 0.0
    %1273 = vmatpush1.msra.mxu0 %v988
    %1274 = vmatprep.subr.mxu0 0.0
    %1275 = vmatpush1.msra.mxu0 %v989
    %1276 = vmatprep.subr.mxu0 0.0
    %1277 = vmatpush1.msra.mxu0 %v990
    %1278 = vmatprep.subr.mxu0 0.0
    %1279 = vmatpush1.msra.mxu0 %v991
    %1280 = vmatprep.subr.mxu0 0.0
    %1281 = vmatpush1.msra.mxu0 %v992
    %1282 = vmatprep.subr.mxu0 0.0
    %1283 = vmatpush1.msra.mxu0 %v993
    %1284 = vmatprep.subr.mxu0 0.0
    %1285 = vmatpush1.msra.mxu0 %v994
    %1286 = vmatprep.subr.mxu0 0.0
    %1287 = vmatpush1.msra.mxu0 %v995
    %1288 = vmatprep.subr.mxu0 0.0
    %1289 = vmatpush1.msra.mxu0 %v996
    %1290 = vmatprep.subr.mxu0 0.0
    %1291 = vmatpush1.msra.mxu0 %v997
    %1292 = vmatprep.subr.mxu0 0.0
    %1293 = vmatpush1.msra.mxu0 %v998
    %1294 = vmatprep.subr.mxu0 0.0
    %1295 = vmatpush1.msra.mxu0 %v999
    %1296 = vmatprep.subr.mxu0 0.0
    %1297 = vmatpush1.msra.mxu0 %v1000
    %1298 = vmatprep.subr.mxu0 0.0
    %1299 = vmatpush1.msra.mxu0 %v1001
    %1300 = vmatprep.subr.mxu0 0.0
    %1301 = vmatpush1.msra.mxu0 %v1002
    %1302 = vmatprep.subr.mxu0 0.0
    %1303 = vmatpush1.msra.mxu0 %v1003
    %1304 = vmatprep.subr.mxu0 0.0
    %1305 = vmatpush1.msra.mxu0 %v1004
    %1306 = vmatprep.subr.mxu0 0.0
    %1307 = vmatpush1.msra.mxu0 %v1005
    %1308 = vmatprep.subr.mxu0 0.0
    %1309 = vmatpush1.msra.mxu0 %v1006
    %1310 = vmatprep.subr.mxu0 0.0
    %1311 = vmatpush1.msra.mxu0 %v1007
    %1312 = vmatprep.subr.mxu0 0.0
    %1313 = vmatpush1.msra.mxu0 %v1008
    %1314 = vmatprep.subr.mxu0 0.0
    %1315 = vmatpush1.msra.mxu0 %v1009
    %1316 = vmatprep.subr.mxu0 0.0
    %1317 = vmatpush1.msra.mxu0 %v1010
    %1318 = vmatprep.subr.mxu0 0.0
    %1319 = vmatpush1.msra.mxu0 %v1011
    %1320 = vmatprep.subr.mxu0 0.0
    %1321 = vmatpush1.msra.mxu0 %v1012
    %1322 = vmatprep.subr.mxu0 0.0
    %1323 = vmatpush1.msra.mxu0 %v1013
    %1324 = vmatprep.subr.mxu0 0.0
    %1325 = vmatpush1.msra.mxu0 %v1014
    %1326 = vmatprep.subr.mxu0 0.0
    %1327 = vmatpush1.msra.mxu0 %v1015
    %1328 = vmatprep.subr.mxu0 0.0
    %1329 = vmatpush1.msra.mxu0 %v1016
    %1330 = vmatprep.subr.mxu0 0.0
    %1331 = vmatpush1.msra.mxu0 %v1017
    %1332 = vmatprep.mubr.f32.mxu0 %v1049
    %1333 = vmatmul.mubr.f32.gmra.mrb[0].mxu0 %v1048
    %v1334 = vpop.f32.mrb[0].mxu0
    %v1335 = vadd.f32 %v1265, %v1334
    %v1336 = vpop.f32.mrb[0].mxu0
    %1337 = vdwg.mxu0
    %1338 = vst [vmem:[#allocation2] sm:$0x3] %v1335
    // Predicated region
    $region22: #{baseline_head_forward.1} parent=1 // pred_check
      _
    $region23: #{baseline_head_forward.1} parent=1 // pred_check_branch
      %1340 = sbr.rel (0) target = $region25
    $region24: #{baseline_head_forward.1} parent=1 // pred_region
      %s1342 = ssub.s32 32, 32
      %1343 = vsyncadd [#allocation3], %s1342
      %s1345 = sshll.u32 [#allocation2], 4
      %s1346 = int_to_ptr.vmem [resolvable:$true] %s1345
      %1348 = dma.vmem_to_hbm [thread:$0]  %s1346, 32, %s5, [#allocation3]
    $region25: #{baseline_head_forward.1} parent=1 // pred_fallthru
      _
    // Predicated region
    $region26: #{baseline_head_forward.1} parent=1 // pred_check
      _
    $region27: #{baseline_head_forward.1} parent=1 // pred_check_branch
      %1350 = sbr.rel (0) target = $region29
    $region28: #{baseline_head_forward.1} parent=1 // pred_region
      %1351 = dma.done [#allocation3], 32
    $region29: #{baseline_head_forward.1} parent=1 // pred_fallthru
      _
    %1352 = vsyncpa [#allocation3], 1

</llo_original>
